<compile_context>
chip_gen: v5e
topology: v5e:2x2
jax: 0.10.0
libtpu: 0.0.40
codegen_flags: <defaults>
</compile_context>

<pallas_src>
import math
from functools import partial

import jax
import jax.numpy as jnp
from jax.experimental import pallas as pl
from jax.experimental.pallas import tpu as pltpu


# ----------------------------------------------------------------------------
# model dimensions (small, lane-aligned analogues of the reference dims)
# ----------------------------------------------------------------------------
C_IN = 3                 # image channels
IMG = 16                 # spatial
KSIZE = 4                # conv kernel == stride  -> 4x4 feature map per branch
C_FEAT = 64              # per-branch channels          (ResNet50 -> 2048)
FEAT_DIM = 2 * C_FEAT    # concat factual|aesthetic     (4096 in reference)
HIDDEN = 128             # (512 in reference)
EMBED = 128              # (300 in reference)
VOCAB = 256              # (400003 in reference)
K_FAN = KSIZE * KSIZE * C_IN   # 48
K_PAD = 128                    # zero-padded contraction dim (lane-dense LHS)


# ----------------------------------------------------------------------------
# Pallas kernels
# ----------------------------------------------------------------------------

def _encoder_kernel(p_ref, w_ref, b_ref, o_ref):
    """Fused both-branch conv: patches (M,K) @ W_fused (K,2C) + b -> (M,2C).

    LHS patches are shared between the factual and aesthetic branches; fusing
    the weights halves patch loads / MXU passes and removes the feature concat.
    Both operands arrive as bf16 (cast in the wrapper), accumulate in f32.
    """
    y = jnp.dot(p_ref[...], w_ref[...],
                preferred_element_type=jnp.float32) + b_ref[...]
    o_ref[...] = y.astype(o_ref.dtype)


def pallas_encoder_conv(patches, w, b):
    M, K = patches.shape
    _, N = w.shape
    return pl.pallas_call(
        _encoder_kernel,
        out_shape=jax.ShapeDtypeStruct((M, N), jnp.float32),
        grid=(1,),
        in_specs=[
            pl.BlockSpec((M, K), lambda i: (0, 0)),
            pl.BlockSpec((K, N), lambda i: (0, 0)),
            pl.BlockSpec((1, N), lambda i: (0, 0)),
        ],
        out_specs=pl.BlockSpec((M, N), lambda i: (0, 0)),
        compiler_params=pltpu.CompilerParams(
            dimension_semantics=("arbitrary",),
            vmem_limit_bytes=32 * 1024 * 1024),
    )(patches, w, b)


def _decoder_kernel(feat_ref, init_w_ref, init_b_ref, x_ref, wih_ref, whh_ref,
                    b_lstm_ref, fc_w_ref, fc_b_ref, out_ref, *, T, B, H):
    """Fused decoder: init_hidden + LSTM recurrence + dense fc.

    feat:(B,N,F) bf16   init_w:(F,2H) bf16   init_b:(1,2H) f32 -> h0|c0 (1 dot)
    x:(T*B,E) bf16      wih:(E,4H) bf16      b_lstm:(1,4H) f32 -> xp hoisted (1 dot)
    whh:(H,4H) bf16 (read per step from VMEM -> no big live value across unroll)
    fc_w:(H,V) bf16     fc_b:(1,V) f32       -> one lane-dense (T*B, V) store
    Activations / h / c stay f32 (VPU/EUP math in f32; only dot operands bf16).
    """
    # ---- init_hidden: mean over tokens, fused init_h|init_c projection ----
    fmean = jnp.mean(feat_ref[...].astype(jnp.float32), axis=1)          # (B, F)
    hc = jnp.tanh(jnp.dot(fmean.astype(init_w_ref.dtype), init_w_ref[...],
                          preferred_element_type=jnp.float32) + init_b_ref[...])
    h = hc[:, :H]
    c = hc[:, H:]

    # ---- hoisted LSTM input projection: one MXU pass for all timesteps ----
    xp = (jnp.dot(x_ref[...], wih_ref[...],
                  preferred_element_type=jnp.float32) + b_lstm_ref[...])
    xp = xp.reshape(T, B, 4 * H)          # contiguous leading-dim split (cheap)

    # ---- recurrence (PyTorch gate order i,f,g,o); T small -> static unroll ----
    hs = []
    for t in range(T):
        # whh re-read from VMEM each step (vld is cheap; avoids holding a big
        # weight tile live across the whole unrolled serial chain).
        gates = (jnp.dot(h.astype(whh_ref.dtype), whh_ref[...],
                         preferred_element_type=jnp.float32) + xp[t])
        sig = jax.nn.sigmoid(gates)              # one EUP pass over (B, 4H)
        i_g = sig[:, 0 * H:1 * H]
        f_g = sig[:, 1 * H:2 * H]
        o_g = sig[:, 3 * H:4 * H]
        g_g = jnp.tanh(gates[:, 2 * H:3 * H])
        c = f_g * c + i_g * g_g
        h = o_g * jnp.tanh(c)
        hs.append(h)                              # stays in vregs (B=2, H=128)

    # ---- dense fc on all T*B hidden states (bf16 MXU operands, f32 acc);
    #      pack_padded row selection happens outside the kernel. ----
    dense_h = jnp.concatenate(hs, axis=0)                                 # (T*B, H)
    out_ref[...] = (jnp.dot(dense_h.astype(fc_w_ref.dtype), fc_w_ref[...],
                            preferred_element_type=jnp.float32)
                    + fc_b_ref[...]).astype(out_ref.dtype)


def pallas_decoder(feat, init_w, init_b, x_flat, wih, whh, b_lstm, fc_w, fc_b):
    B, N, F = feat.shape
    TB, E = x_flat.shape
    H = whh.shape[0]
    T = TB // B
    V = fc_w.shape[1]
    kern = partial(_decoder_kernel, T=T, B=B, H=H)
    return pl.pallas_call(
        kern,
        out_shape=jax.ShapeDtypeStruct((TB, V), jnp.float32),
        grid=(1,),
        in_specs=[
            pl.BlockSpec((B, N, F), lambda i: (0, 0, 0)),
            pl.BlockSpec((F, 2 * H), lambda i: (0, 0)),
            pl.BlockSpec((1, 2 * H), lambda i: (0, 0)),
            pl.BlockSpec((TB, E), lambda i: (0, 0)),
            pl.BlockSpec((E, 4 * H), lambda i: (0, 0)),
            pl.BlockSpec((H, 4 * H), lambda i: (0, 0)),
            pl.BlockSpec((1, 4 * H), lambda i: (0, 0)),
            pl.BlockSpec((H, V), lambda i: (0, 0)),
            pl.BlockSpec((1, V), lambda i: (0, 0)),
        ],
        out_specs=pl.BlockSpec((TB, V), lambda i: (0, 0)),
        compiler_params=pltpu.CompilerParams(
            dimension_semantics=("arbitrary",),
            vmem_limit_bytes=32 * 1024 * 1024),
    )(feat, init_w, init_b, x_flat, wih, whh, b_lstm, fc_w, fc_b)


# ----------------------------------------------------------------------------
# parameters
# ----------------------------------------------------------------------------

def init_params(key):
    ks = jax.random.split(key, 10)
    p = {}
    # fused encoder conv weight: [factual | aesthetic] along N, zero-padded
    # along K to the lane-dense contraction dim; bf16 for the MXU.
    w_fact = jax.random.normal(ks[0], (K_FAN, C_FEAT), jnp.float32) / math.sqrt(K_FAN)
    w_aest = jax.random.normal(ks[1], (K_FAN, C_FEAT), jnp.float32) / math.sqrt(K_FAN)
    w = jnp.concatenate([w_fact, w_aest], axis=1)                 # (K_FAN, 2C)
    w = jnp.pad(w, ((0, K_PAD - K_FAN), (0, 0)))                  # (K_PAD, 2C)
    p["enc_w"] = w.astype(jnp.bfloat16)
    p["enc_b"] = jnp.zeros((1, FEAT_DIM), jnp.float32)
    # decoder embedding N(0,1)
    p["embedding"] = jax.random.normal(ks[2], (VOCAB, EMBED), jnp.float32)
    # fused init_h|init_c : kaiming-normal weights, zero bias (stored transposed)
    std_init = math.sqrt(2.0 / FEAT_DIM)
    wh = jax.random.normal(ks[3], (FEAT_DIM, HIDDEN), jnp.float32) * std_init
    wc = jax.random.normal(ks[4], (FEAT_DIM, HIDDEN), jnp.float32) * std_init
    p["init_w"] = jnp.concatenate([wh, wc], axis=1).astype(jnp.bfloat16)  # (F, 2H)
    p["init_b"] = jnp.zeros((1, 2 * HIDDEN), jnp.float32)
    # LSTM: PyTorch default U(-1/sqrt(H), 1/sqrt(H)); gate order i,f,g,o
    bound = 1.0 / math.sqrt(HIDDEN)
    p["lstm_wih"] = jax.random.uniform(
        ks[5], (EMBED, 4 * HIDDEN), jnp.float32, -bound, bound).astype(jnp.bfloat16)
    p["lstm_whh"] = jax.random.uniform(
        ks[6], (HIDDEN, 4 * HIDDEN), jnp.float32, -bound, bound).astype(jnp.bfloat16)
    b_ih = jax.random.uniform(ks[7], (1, 4 * HIDDEN), jnp.float32, -bound, bound)
    b_hh = jax.random.uniform(ks[8], (1, 4 * HIDDEN), jnp.float32, -bound, bound)
    p["lstm_b"] = b_ih + b_hh
    # fc: kaiming-normal, zero bias (stored transposed, bf16 for MXU/streaming)
    std_fc = math.sqrt(2.0 / HIDDEN)
    p["fc_w"] = (jax.random.normal(ks[9], (HIDDEN, VOCAB), jnp.float32)
                 * std_fc).astype(jnp.bfloat16)
    p["fc_b"] = jnp.zeros((1, VOCAB), jnp.float32)
    return p


# ----------------------------------------------------------------------------
# forward (thin JAX glue around the two fused Pallas kernels)
# ----------------------------------------------------------------------------

def encoder_forward(params, x_nchw):
    x_nhwc = jnp.transpose(x_nchw, (0, 2, 3, 1))
    B, Hh, Ww, C = x_nhwc.shape
    ph, pw = Hh // KSIZE, Ww // KSIZE
    patches = x_nhwc.reshape(B, ph, KSIZE, pw, KSIZE, C)
    patches = patches.transpose(0, 1, 3, 2, 4, 5).reshape(B * ph * pw, K_FAN)
    # zero-pad the contraction dim to 128 lanes and cast to bf16 (halves DMA,
    # removes masked lane loads).
    patches = jnp.pad(patches, ((0, 0), (0, K_PAD - K_FAN))).astype(jnp.bfloat16)
    y = pallas_encoder_conv(patches, params["enc_w"], params["enc_b"])  # (B*N, 2C)
    # NHWC feature map flattened row-major == permute(0,2,3,1).view(B,-1,C),
    # columns already ordered [factual | aesthetic] == torch.cat(..., dim=-1)
    return y.reshape(B, ph * pw, FEAT_DIM)


def decoder_forward(params, encoder_feat, gt_captions, captions_len):
    """Mirrors Decoder.forward: init_hidden -> embed -> LSTM -> fc -> pack-select."""
    B = encoder_feat.shape[0]
    T = gt_captions.shape[1] - 1        # shape-stable timestep count (padded)
    eff_lens = [int(l) - 1 for l in captions_len]

    # embedding lookup (XLA glue), time-major flattened rows (row = t*B + b)
    word_vectors = jnp.take(params["embedding"], gt_captions[:, :T], axis=0)  # (B,T,E)
    x_flat = (jnp.transpose(word_vectors, (1, 0, 2))
              .reshape(T * B, EMBED).astype(jnp.bfloat16))

    # fused decoder kernel -> dense logits for all T*B (t, b) positions
    dense = pallas_decoder(
        encoder_feat.astype(jnp.bfloat16),
        params["init_w"], params["init_b"], x_flat,
        params["lstm_wih"], params["lstm_whh"], params["lstm_b"],
        params["fc_w"], params["fc_b"])                                  # (T*B, V)

    # pack_padded_sequence row order (lengths sorted descending, batch_first):
    # for each timestep t, batch rows b with eff_len[b] > t, in batch order.
    packed_idx = [t * B + b for t in range(T) for b in range(B) if eff_lens[b] > t]
    return jnp.take(dense, jnp.asarray(packed_idx, dtype=jnp.int32), axis=0)


def aesthetic_captioning_forward(params, xb, captions, captions_len):
    encoder_feat = encoder_forward(params, xb)
    return decoder_forward(params, encoder_feat, captions, captions_len)


# ----------------------------------------------------------------------------

if __name__ == "__main__":
    key = jax.random.PRNGKey(0)
    k_img, k_cap, k_param = jax.random.split(key, 3)

    B, T_CAP = 2, 6
    xb = jax.random.normal(k_img, (B, C_IN, IMG, IMG), jnp.float32)      # NCHW
    captions = jax.random.randint(k_cap, (B, T_CAP), 0, VOCAB, jnp.int32)
    captions_len = [6, 5]                                                # sorted desc

    params = init_params(k_param)

    pred = aesthetic_captioning_forward(params, xb, captions, captions_len)
    pred = jax.block_until_ready(pred)

    expected_rows = sum(l - 1 for l in captions_len)
    assert pred.shape == (expected_rows, VOCAB), pred.shape
    assert bool(jnp.all(jnp.isfinite(pred)))
    print("KERNEL_OK")
</pallas_src>

<mosaic_0001>
module attributes {stable_mosaic.version = 11 : i64} {
  func.func @_encoder_kernel(%arg0: i32, %arg1: memref<32x128xbf16, #tpu.memory_space<vmem>>, %arg2: memref<128x128xbf16, #tpu.memory_space<vmem>>, %arg3: memref<1x128xf32, #tpu.memory_space<vmem>>, %arg4: memref<32x128xf32, #tpu.memory_space<vmem>>) attributes {dimension_semantics = [#tpu.dimension_semantics<arbitrary>], iteration_bounds = array<i64: 1>, scalar_prefetch = 0 : i64, scratch_operands = 0 : i64, tpu.core_type = #tpu.core_type<tc>, window_params = [{pipeline_mode = #tpu.pipeline_mode<synchronous>, transform_indices = @transform_0, window_bounds = array<i64: 32, 128>}, {pipeline_mode = #tpu.pipeline_mode<synchronous>, transform_indices = @transform_1, window_bounds = array<i64: 128, 128>}, {pipeline_mode = #tpu.pipeline_mode<synchronous>, transform_indices = @transform_2, window_bounds = array<i64: 1, 128>}, {pipeline_mode = #tpu.pipeline_mode<synchronous>, transform_indices = @transform_3, window_bounds = array<i64: 32, 128>}]} {
    %c0 = arith.constant 0 : index
    %c0_0 = arith.constant 0 : index
    %0 = vector.load %arg1[%c0, %c0_0] : memref<32x128xbf16, #tpu.memory_space<vmem>>, vector<32x128xbf16>
    %c0_1 = arith.constant 0 : index
    %c0_2 = arith.constant 0 : index
    %1 = vector.load %arg2[%c0_1, %c0_2] : memref<128x128xbf16, #tpu.memory_space<vmem>>, vector<128x128xbf16>
    %cst = arith.constant dense<0.000000e+00> : vector<32x128xf32>
    %2 = tpu.matmul %0, %1, %cst {dimension_numbers = #tpu.dot_dimension_numbers<[1], [0], [0], [1], [0, 0, 1, 1], [], []>} : vector<32x128xbf16>, vector<128x128xbf16>, vector<32x128xf32> -> vector<32x128xf32>
    %c0_3 = arith.constant 0 : index
    %c0_4 = arith.constant 0 : index
    %3 = vector.load %arg3[%c0_3, %c0_4] : memref<1x128xf32, #tpu.memory_space<vmem>>, vector<1x128xf32>
    %4 = vector.broadcast %3 : vector<1x128xf32> to vector<32x128xf32>
    %5 = arith.addf %2, %4 : vector<32x128xf32>
    %c0_5 = arith.constant 0 : index
    %c0_6 = arith.constant 0 : index
    %6 = vector.load %arg4[%c0_5, %c0_6] : memref<32x128xf32, #tpu.memory_space<vmem>>, vector<32x128xf32>
    tpu.vector_store %arg4[%c0_5, %c0_6], %5 {strides = array<i32>} : memref<32x128xf32, #tpu.memory_space<vmem>>, vector<32x128xf32>,
    return
  }
  func.func @transform_0(%arg0: i32) -> (i32, i32) {
    %c0_i32 = arith.constant 0 : i32
    %c0_i32_0 = arith.constant 0 : i32
    %c0_i32_1 = arith.constant 0 : i32
    return %c0_i32, %c0_i32_0 : i32, i32
  }
  func.func @transform_1(%arg0: i32) -> (i32, i32) {
    %c0_i32 = arith.constant 0 : i32
    %c0_i32_0 = arith.constant 0 : i32
    %c0_i32_1 = arith.constant 0 : i32
    return %c0_i32, %c0_i32_0 : i32, i32
  }
  func.func @transform_2(%arg0: i32) -> (i32, i32) {
    %c0_i32 = arith.constant 0 : i32
    %c0_i32_0 = arith.constant 0 : i32
    %c0_i32_1 = arith.constant 0 : i32
    return %c0_i32, %c0_i32_0 : i32, i32
  }
  func.func @transform_3(%arg0: i32) -> (i32, i32) {
    %c0_i32 = arith.constant 0 : i32
    %c0_i32_0 = arith.constant 0 : i32
    %c0_i32_1 = arith.constant 0 : i32
    return %c0_i32, %c0_i32_0 : i32, i32
  }
}

</mosaic_0001>

<llo_original>
// kernel: tpu_custom_call.1
$region0: #{tpu_custom_call.1}
  #allocation0 [shape = 'u32[]', space=smem, size = 0x4, offset = 0x4, fixed_abs, tag = 'smem constant byte address 0x4 - core index']
  #allocation1 [shape = 'u32[72,128]{1,0:T(1,128)}', space=vmem, size = 0x9000, scoped, tag = 'internal scratch']
  %s0 = inlined_call_operand.hbm [shape: bf16[32,128], index: 0, kind: input, shape index: {}]
  %s1 = inlined_call_operand.hbm [shape: bf16[128,128], index: 1, kind: input, shape index: {}]
  %s2 = inlined_call_operand.vmem [shape: f32[1,128], index: 2, kind: input, shape index: {}]
  %s3 = inlined_call_operand.hbm [shape: f32[32,128], index: 3, kind: output, shape index: {}]
  %s4 = sld [smem:[#allocation0]]
  $region30: #{tpu_custom_call.1} parent=0
    _
  %s6 = ssub.s32 1, %s4
  %s7 = scalar_select 0, %s6, %s4
  $region1: #{tpu_custom_call.1} parent=0
    #allocation2 [shape = 'u8[8192]{0}', space=vmem, size = 0x2000, scoped, tag = 'input window, operand 0, single buffered']
    #allocation3 [shape = 's32[1]{0}', space=sflag, size = 0x4, scoped, tag = 'scoped memory for tpu_custom_call.1']
    #allocation4 [shape = 's32[1]{0}', space=sflag, size = 0x4, scoped, tag = 'scoped memory for tpu_custom_call.1']
    #allocation5 [shape = 'u8[32768]{0}', space=vmem, size = 0x8000, scoped, tag = 'input window, operand 1, single buffered']
    #allocation6 [shape = 's32[1]{0}', space=sflag, size = 0x4, scoped, tag = 'scoped memory for tpu_custom_call.1']
    #allocation7 [shape = 'u8[16384]{0}', space=vmem, size = 0x4000, scoped, tag = 'output window, operand 0, single buffered']
    %8 = vsyncpa [#allocation3], 0
    %9 = vsyncpa [#allocation6], 0
    %10 = vsyncpa [#allocation4], 0
    // Predicated region
    $region2: #{tpu_custom_call.1} parent=1 // pred_check
      _
    $region3: #{tpu_custom_call.1} parent=1 // pred_check_branch
      %12 = sbr.rel (0) target = $region5
    $region4: #{tpu_custom_call.1} parent=1 // pred_region
      %14 = vsyncadd [#allocation3], 0
      %s15 = sshll.u32 %s0, 4
      %s16 = int_to_ptr.hbm [resolvable:$true] %s15
      %s17 = sshll.u32 [#allocation2], 4
      %s18 = int_to_ptr.vmem [resolvable:$true] %s17
      %23 = dma.hbm_to_vmem [thread:$0]  %s16, 256, %s18, [#allocation3], 64, 64, 4
    $region5: #{tpu_custom_call.1} parent=1 // pred_fallthru
      _
    // Predicated region
    $region6: #{tpu_custom_call.1} parent=1 // pred_check
      _
    $region7: #{tpu_custom_call.1} parent=1 // pred_check_branch
      %25 = sbr.rel (0) target = $region9
    $region8: #{tpu_custom_call.1} parent=1 // pred_region
      %27 = vsyncadd [#allocation6], 0
      %s28 = sshll.u32 %s1, 4
      %s29 = int_to_ptr.hbm [resolvable:$true] %s28
      %s30 = sshll.u32 [#allocation5], 4
      %s31 = int_to_ptr.vmem [resolvable:$true] %s30
      %36 = dma.hbm_to_vmem [thread:$0]  %s29, 1024, %s31, [#allocation6], 64, 64, 4
    $region9: #{tpu_custom_call.1} parent=1 // pred_fallthru
      _
    // Predicated region
    $region10: #{tpu_custom_call.1} parent=1 // pred_check
      _
    $region11: #{tpu_custom_call.1} parent=1 // pred_check_branch
      %38 = sbr.rel (0) target = $region13
    $region12: #{tpu_custom_call.1} parent=1 // pred_region
      _
    $region13: #{tpu_custom_call.1} parent=1 // pred_fallthru
      _
    // Predicated region
    $region14: #{tpu_custom_call.1} parent=1 // pred_check
      _
    $region15: #{tpu_custom_call.1} parent=1 // pred_check_branch
      %40 = sbr.rel (0) target = $region17
    $region16: #{tpu_custom_call.1} parent=1 // pred_region
      %42 = dma.done [#allocation3], 256
    $region17: #{tpu_custom_call.1} parent=1 // pred_fallthru
      _
    // Predicated region
    $region18: #{tpu_custom_call.1} parent=1 // pred_check
      _
    $region19: #{tpu_custom_call.1} parent=1 // pred_check_branch
      %44 = sbr.rel (0) target = $region21
    $region20: #{tpu_custom_call.1} parent=1 // pred_region
      %46 = dma.done [#allocation6], 1024
    $region21: #{tpu_custom_call.1} parent=1 // pred_fallthru
      _
    %v47 = vld [vmem:[#allocation2] sm:$0xf]
    %v48 = vld [vmem:[#allocation2 + $0x4] sm:$0xf]
    %v49 = vld [vmem:[#allocation2 + $0x8] sm:$0xf]
    %v50 = vld [vmem:[#allocation2 + $0xc] sm:$0xf]
    %v51 = vld [vmem:[#allocation5] sm:$0xf]
    %v52 = vld [vmem:[#allocation5 + $0x4] sm:$0xf]
    %v53 = vld [vmem:[#allocation5 + $0x8] sm:$0xf]
    %v54 = vld [vmem:[#allocation5 + $0xc] sm:$0xf]
    %v55 = vld [vmem:[#allocation5 + $0x10] sm:$0xf]
    %v56 = vld [vmem:[#allocation5 + $0x14] sm:$0xf]
    %v57 = vld [vmem:[#allocation5 + $0x18] sm:$0xf]
    %v58 = vld [vmem:[#allocation5 + $0x1c] sm:$0xf]
    %v59 = vld [vmem:[#allocation5 + $0x20] sm:$0xf]
    %v60 = vld [vmem:[#allocation5 + $0x24] sm:$0xf]
    %v61 = vld [vmem:[#allocation5 + $0x28] sm:$0xf]
    %v62 = vld [vmem:[#allocation5 + $0x2c] sm:$0xf]
    %v63 = vld [vmem:[#allocation5 + $0x30] sm:$0xf]
    %v64 = vld [vmem:[#allocation5 + $0x34] sm:$0xf]
    %v65 = vld [vmem:[#allocation5 + $0x38] sm:$0xf]
    %v66 = vld [vmem:[#allocation5 + $0x3c] sm:$0xf]
    %v67 = vld [vmem:[%s2] sm:$0x1]
    %v69 = vperm.slane %v67, 0
    %v75 = vunpack.c.l.b16 %v47
    %v76 = vunpack.c.l.b16 %v48
    %v77 = vunpack.c.l.b16 %v49
    %v78 = vunpack.c.l.b16 %v50
    %v79 = vpack.c.b16 %v76, %v75
    %v80 = vpack.c.b16 %v78, %v77
    %v99 = vunpack.c.l.b16 %v51
    %v100 = vunpack.c.l.b16 %v52
    %v101 = vunpack.c.l.b16 %v53
    %v102 = vunpack.c.l.b16 %v54
    %v103 = vunpack.c.l.b16 %v55
    %v104 = vunpack.c.l.b16 %v56
    %v105 = vunpack.c.l.b16 %v57
    %v106 = vunpack.c.l.b16 %v58
    %v107 = vunpack.c.l.b16 %v59
    %v108 = vunpack.c.l.b16 %v60
    %v109 = vunpack.c.l.b16 %v61
    %v110 = vunpack.c.l.b16 %v62
    %v111 = vunpack.c.l.b16 %v63
    %v112 = vunpack.c.l.b16 %v64
    %v113 = vunpack.c.l.b16 %v65
    %v114 = vunpack.c.l.b16 %v66
    %v115 = vpack.c.b16 %v100, %v99
    %v116 = vpack.c.b16 %v102, %v101
    %v117 = vpack.c.b16 %v104, %v103
    %v118 = vpack.c.b16 %v106, %v105
    %v119 = vpack.c.b16 %v108, %v107
    %v120 = vpack.c.b16 %v110, %v109
    %v121 = vpack.c.b16 %v112, %v111
    %v122 = vpack.c.b16 %v114, %v113
    %131 = vmatpush.bf16.msra.mxu0 %v122
    %132 = vmatpush.bf16.msra.mxu0 %v121
    %133 = vmatpush.bf16.msra.mxu0 %v120
    %134 = vmatpush.bf16.msra.mxu0 %v119
    %135 = vmatpush.bf16.msra.mxu0 %v118
    %136 = vmatpush.bf16.msra.mxu0 %v117
    %137 = vmatpush.bf16.msra.mxu0 %v116
    %138 = vmatpush.bf16.msra.mxu0 %v115
    %139 = vmatmul.bf16.gmra.mxu0 %v79
    %v140 = vpop.f32.mrf.mxu0
    %v141 = vadd.f32 %v69, %v140
    %v142 = vpop.f32.mrf.mxu0
    %v143 = vadd.f32 %v69, %v142
    %144 = vmatmul.bf16.gmra.mxu0 %v80
    %v145 = vpop.f32.mrf.mxu0
    %v146 = vadd.f32 %v69, %v145
    %v147 = vpop.f32.mrf.mxu0
    %v148 = vadd.f32 %v69, %v147
    %149 = vdwg.mxu0
    %150 = vst [vmem:[#allocation7] sm:$0xff] %v141
    %151 = vst [vmem:[#allocation7 + $0x8] sm:$0xff] %v143
    %152 = vst [vmem:[#allocation7 + $0x10] sm:$0xff] %v146
    %153 = vst [vmem:[#allocation7 + $0x18] sm:$0xff] %v148
    // Predicated region
    $region22: #{tpu_custom_call.1} parent=1 // pred_check
      _
    $region23: #{tpu_custom_call.1} parent=1 // pred_check_branch
      %155 = sbr.rel (0) target = $region25
    $region24: #{tpu_custom_call.1} parent=1 // pred_region
      %157 = vsyncadd [#allocation4], 0
      %s158 = sshll.u32 [#allocation7], 4
      %s159 = int_to_ptr.vmem [resolvable:$true] %s158
      %s160 = sshll.u32 %s3, 4
      %s161 = int_to_ptr.hbm [resolvable:$true] %s160
      %166 = dma.vmem_to_hbm [thread:$0]  %s159, 512, %s161, [#allocation4], 128, 128, 8
    $region25: #{tpu_custom_call.1} parent=1 // pred_fallthru
      _
    // Predicated region
    $region26: #{tpu_custom_call.1} parent=1 // pred_check
      _
    $region27: #{tpu_custom_call.1} parent=1 // pred_check_branch
      %168 = sbr.rel (0) target = $region29
    $region28: #{tpu_custom_call.1} parent=1 // pred_region
      %170 = dma.done [#allocation4], 512
    $region29: #{tpu_custom_call.1} parent=1 // pred_fallthru
      _
    %171 = vsyncpa [#allocation3], 1
    %172 = vsyncpa [#allocation6], 1
    %173 = vsyncpa [#allocation4], 1

</llo_original>
